<compile_context>
chip_gen: v7x
topology: tpu7x:2x2x1
jax: 0.10.0
libtpu: 0.0.40
codegen_flags: <defaults>
</compile_context>

<pallas_src>
import jax
import jax.numpy as jnp
from jax.experimental import pallas as pl
from jax.experimental.pallas import tpu as pltpu


def _round_up(x, n):
    return (x + n - 1) // n * n


def _embed_kernel(patches_ref, w_ref, pos_ref, out_ref):
    """One grid step: embeds `m` whole images.

    patches_ref: (m, N, K)   bf16 flattened patches (im2col) for m images
    w_ref:       (K, D)      bf16 flattened Conv2d weight (constant block, resident)
    pos_ref:     (N+1, D)    f32  row 0 = cls_token + pos[0];
                                  rows 1.. = pos[1:] + conv_bias (constant block)
    out_ref:     (m, N+1, D) embeddings (cls row + patch rows), out dtype
    """
    m = out_ref.shape[0]
    for j in range(m):                                   # static unroll, m small
        acc = jnp.dot(patches_ref[j], w_ref[...],
                      preferred_element_type=jnp.float32)          # (N, D) f32
        out_ref[j, 1:, :] = (acc + pos_ref[1:, :]).astype(out_ref.dtype)
        out_ref[j, 0:1, :] = pos_ref[0:1, :].astype(out_ref.dtype)


def vit_embeddings(x, conv_w, conv_b, pos_emb, cls_token, patch_size, *,
                   rows_per_step=1024, compute_dtype=jnp.bfloat16,
                   out_dtype=jnp.bfloat16):
    """ViT patch+position embeddings (eval mode, non-hybrid path).

    x: [B, C, H, W] (NCHW).  conv_w: [D, C, P, P] (kernel == stride),
    conv_b: [D], pos_emb: [1, N+1, D], cls_token: [1, 1, D].
    Returns [B, N+1, D] in out_dtype.
    """
    B, C, H, W = x.shape
    D = conv_w.shape[0]
    P = patch_size
    assert H % P == 0 and W % P == 0, "image size must be a multiple of patch size"
    gh, gw = H // P, W // P
    n_patches = gh * gw
    K = C * P * P

    # Lane-dense contraction: pad K to a multiple of 128 only when it is large
    # and ragged (e.g. P=14 -> K=588); for tiny K padding would only add traffic.
    K_pad = _round_up(K, 128) if (K > 128 and K % 128 != 0) else K

    # --- im2col in the bf16 compute dtype (half-size copy; allow_input_fusion
    # below lets XLA fuse this producer into the pallas operand when possible).
    patches = x.astype(compute_dtype).reshape(B, C, gh, P, gw, P)
    patches = jnp.transpose(patches, (0, 2, 4, 1, 3, 5))   # [B, gh, gw, C, P, P]
    patches = patches.reshape(B, n_patches, K)
    if K_pad != K:
        patches = jnp.pad(patches, ((0, 0), (0, 0), (0, K_pad - K)))

    # Flattened conv weight [K, D] bf16 (row-major (c, ph, pw) matches patches).
    w_mat = conv_w.reshape(D, K).T.astype(compute_dtype)
    if K_pad != K:
        w_mat = jnp.pad(w_mat, ((0, K_pad - K), (0, 0)))

    # Fused bias/positional table, kept f32 (it is DMA'd exactly once, so full
    # precision is essentially free): row 0 = cls_token + pos[0],
    # rows 1..N = pos[1:] + conv_bias.
    pos_f32 = pos_emb.reshape(n_patches + 1, D).astype(jnp.float32)
    cls_row = cls_token.reshape(1, D).astype(jnp.float32) + pos_f32[0:1]
    patch_rows = pos_f32[1:] + conv_b.reshape(1, D).astype(jnp.float32)
    pos_full = jnp.concatenate([cls_row, patch_rows], axis=0)      # (N+1, D)

    # --- m = images per grid step (a divisor of B): big enough to amortize the
    # ~0.35us/step overhead, small enough to keep >=2 parallel steps (v7x
    # two-TensorCore sharding) and a few-MiB VMEM footprint.
    max_m = max(1, min(B, rows_per_step // max(n_patches, 1)))
    if B >= 2:
        max_m = min(max_m, B // 2)
    max_m = min(max_m, 16)                 # bound the static unroll size
    m = 1
    for cand in range(max_m, 0, -1):
        if B % cand == 0:
            m = cand
            break
    n_steps = B // m

    out = pl.pallas_call(
        _embed_kernel,
        out_shape=jax.ShapeDtypeStruct((B, n_patches + 1, D), out_dtype),
        grid_spec=pltpu.PrefetchScalarGridSpec(
            num_scalar_prefetch=0,
            grid=(n_steps,),
            in_specs=[
                pl.BlockSpec((m, n_patches, K_pad), lambda i: (i, 0, 0)),
                # Constant block indices: weight + pos are DMA'd once and stay
                # VMEM-resident across all grid steps (only the spare
                # double-buffer copy is the cost, which is small here).
                pl.BlockSpec((K_pad, D), lambda i: (0, 0)),
                pl.BlockSpec((n_patches + 1, D), lambda i: (0, 0)),
            ],
            out_specs=pl.BlockSpec((m, n_patches + 1, D), lambda i: (i, 0, 0)),
        ),
        compiler_params=pltpu.CompilerParams(
            dimension_semantics=("parallel",),
            vmem_limit_bytes=48 * 1024 * 1024,     # safe on v7x's 64 MiB VMEM
            allow_input_fusion=[True, False, False],
        ),
    )(patches, w_mat, pos_full)

    return out                                          # [B, N+1, D]


def reference_embeddings(x, conv_w, conv_b, pos_emb, cls_token, patch_size,
                         compute_dtype=jnp.bfloat16, out_dtype=jnp.bfloat16):
    """Pure-JAX reference mirroring the PyTorch forward (eval mode) with the
    same bf16-inputs / f32-accumulate / bf16-output numerics as the kernel."""
    B = x.shape[0]
    D = conv_w.shape[0]
    y = jax.lax.conv_general_dilated(
        x.astype(compute_dtype), conv_w.astype(compute_dtype),
        window_strides=(patch_size, patch_size), padding="VALID",
        dimension_numbers=("NCHW", "OIHW", "NCHW"),
        preferred_element_type=jnp.float32)
    y = y + conv_b.reshape(1, D, 1, 1).astype(jnp.float32)
    y = y.reshape(B, D, -1)                    # flatten(2)
    y = jnp.transpose(y, (0, 2, 1))            # transpose(-1, -2)
    cls = jnp.broadcast_to(cls_token.astype(jnp.float32), (B, 1, D))
    y = jnp.concatenate([cls, y], axis=1)
    y = y + pos_emb.astype(jnp.float32)
    return y.astype(out_dtype).astype(jnp.float32)


if __name__ == "__main__":
    # Small config: B=2, in_channels=4, img 16x16, patch 4 -> 16 patches, hidden=32.
    # (Toy dims; real ViT D=768/1024, N=196/576 is the intended regime.)
    B, C, H, W = 2, 4, 16, 16
    P = 4
    D = 32
    n_patches = (H // P) * (W // P)

    key = jax.random.PRNGKey(0)
    kx, kw, kb, kp, kc = jax.random.split(key, 5)

    x = jax.random.normal(kx, (B, C, H, W), dtype=jnp.float32)
    # PyTorch inits pos_emb / cls_token to zeros; small random values are used
    # here so the add paths are exercised.
    conv_w = 0.02 * jax.random.normal(kw, (D, C, P, P), dtype=jnp.float32)
    conv_b = 0.02 * jax.random.normal(kb, (D,), dtype=jnp.float32)
    pos_emb = 0.02 * jax.random.normal(kp, (1, n_patches + 1, D), dtype=jnp.float32)
    cls_token = 0.02 * jax.random.normal(kc, (1, 1, D), dtype=jnp.float32)

    out = vit_embeddings(x, conv_w, conv_b, pos_emb, cls_token, P)
    out = jax.block_until_ready(out)

    ref = reference_embeddings(x, conv_w, conv_b, pos_emb, cls_token, P)
    ref = jax.block_until_ready(ref)

    assert out.shape == (B, n_patches + 1, D), out.shape
    assert out.dtype == jnp.bfloat16, out.dtype
    err = jnp.max(jnp.abs(out.astype(jnp.float32) - ref))
    # bf16 inputs + bf16 output are an intentional numerics change vs. the f32
    # PyTorch conv; accumulation is f32, so the residual is ~1 bf16 ulp.
    assert jnp.allclose(out.astype(jnp.float32), ref, atol=4e-3, rtol=4e-3), float(err)

    print("KERNEL_OK")
</pallas_src>

<mosaic_0001>
module attributes {stable_mosaic.version = 11 : i64} {
  func.func @_embed_kernel(%arg0: i32, %arg1: memref<1x16x64xbf16, #tpu.memory_space<vmem>>, %arg2: memref<64x32xbf16, #tpu.memory_space<vmem>>, %arg3: memref<17x32xf32, #tpu.memory_space<vmem>>, %arg4: memref<1x17x32xbf16, #tpu.memory_space<vmem>>) attributes {dimension_semantics = [#tpu.dimension_semantics<parallel>], iteration_bounds = array<i64: 2>, scalar_prefetch = 0 : i64, scratch_operands = 0 : i64, tpu.core_type = #tpu.core_type<tc>, window_params = [{transform_indices = @transform_0, window_bounds = array<i64: 1, 16, 64>}, {pipeline_mode = #tpu.pipeline_mode<synchronous>, transform_indices = @transform_1, window_bounds = array<i64: 64, 32>}, {pipeline_mode = #tpu.pipeline_mode<synchronous>, transform_indices = @transform_2, window_bounds = array<i64: 17, 32>}, {transform_indices = @transform_3, window_bounds = array<i64: 1, 17, 32>}]} {
    %c0 = arith.constant 0 : index
    %c0_0 = arith.constant 0 : index
    %c0_1 = arith.constant 0 : index
    %0 = vector.load %arg1[%c0, %c0_0, %c0_1] : memref<1x16x64xbf16, #tpu.memory_space<vmem>>, vector<1x16x64xbf16>
    %1 = vector.shape_cast %0 : vector<1x16x64xbf16> to vector<16x64xbf16>
    %c0_2 = arith.constant 0 : index
    %c0_3 = arith.constant 0 : index
    %2 = vector.load %arg2[%c0_2, %c0_3] : memref<64x32xbf16, #tpu.memory_space<vmem>>, vector<64x32xbf16>
    %cst = arith.constant dense<0.000000e+00> : vector<16x32xf32>
    %3 = tpu.matmul %1, %2, %cst {dimension_numbers = #tpu.dot_dimension_numbers<[1], [0], [0], [1], [0, 0, 1, 1], [], []>} : vector<16x64xbf16>, vector<64x32xbf16>, vector<16x32xf32> -> vector<16x32xf32>
    %c1 = arith.constant 1 : index
    %c0_4 = arith.constant 0 : index
    %4 = vector.load %arg3[%c1, %c0_4] : memref<17x32xf32, #tpu.memory_space<vmem>>, vector<16x32xf32>
    %5 = arith.addf %3, %4 : vector<16x32xf32>
    %6 = arith.truncf %5 : vector<16x32xf32> to vector<16x32xbf16>
    %c0_5 = arith.constant 0 : index
    %c1_6 = arith.constant 1 : index
    %c0_7 = arith.constant 0 : index
    %7 = vector.load %arg4[%c0_5, %c1_6, %c0_7] : memref<1x17x32xbf16, #tpu.memory_space<vmem>>, vector<1x16x32xbf16>
    %8 = vector.shape_cast %7 : vector<1x16x32xbf16> to vector<16x32xbf16>
    %9 = vector.shape_cast %6 : vector<16x32xbf16> to vector<1x16x32xbf16>
    tpu.vector_store %arg4[%c0_5, %c1_6, %c0_7], %9 {strides = array<i32>} : memref<1x17x32xbf16, #tpu.memory_space<vmem>>, vector<1x16x32xbf16>,
    %c0_8 = arith.constant 0 : index
    %c0_9 = arith.constant 0 : index
    %10 = vector.load %arg3[%c0_8, %c0_9] : memref<17x32xf32, #tpu.memory_space<vmem>>, vector<1x32xf32>
    %11 = arith.truncf %10 : vector<1x32xf32> to vector<1x32xbf16>
    %c0_10 = arith.constant 0 : index
    %c0_11 = arith.constant 0 : index
    %c0_12 = arith.constant 0 : index
    %12 = vector.load %arg4[%c0_10, %c0_11, %c0_12] : memref<1x17x32xbf16, #tpu.memory_space<vmem>>, vector<1x1x32xbf16>
    %13 = vector.shape_cast %12 : vector<1x1x32xbf16> to vector<1x32xbf16>
    %14 = vector.shape_cast %11 : vector<1x32xbf16> to vector<1x1x32xbf16>
    tpu.vector_store %arg4[%c0_10, %c0_11, %c0_12], %14 {strides = array<i32>} : memref<1x17x32xbf16, #tpu.memory_space<vmem>>, vector<1x1x32xbf16>,
    return
  }
  func.func @transform_0(%arg0: i32) -> (i32, i32, i32) {
    %c0_i32 = arith.constant 0 : i32
    %c0_i32_0 = arith.constant 0 : i32
    %c0_i32_1 = arith.constant 0 : i32
    return %arg0, %c0_i32, %c0_i32_0 : i32, i32, i32
  }
  func.func @transform_1(%arg0: i32) -> (i32, i32) {
    %c0_i32 = arith.constant 0 : i32
    %c0_i32_0 = arith.constant 0 : i32
    %c0_i32_1 = arith.constant 0 : i32
    return %c0_i32, %c0_i32_0 : i32, i32
  }
  func.func @transform_2(%arg0: i32) -> (i32, i32) {
    %c0_i32 = arith.constant 0 : i32
    %c0_i32_0 = arith.constant 0 : i32
    %c0_i32_1 = arith.constant 0 : i32
    return %c0_i32, %c0_i32_0 : i32, i32
  }
  func.func @transform_3(%arg0: i32) -> (i32, i32, i32) {
    %c0_i32 = arith.constant 0 : i32
    %c0_i32_0 = arith.constant 0 : i32
    %c0_i32_1 = arith.constant 0 : i32
    return %arg0, %c0_i32, %c0_i32_0 : i32, i32, i32
  }
}

</mosaic_0001>

<llo_original>
// kernel: tpu_custom_call.1
$region0: #{tpu_custom_call.1}
  #allocation0 [shape = 'u32[]', space=smem, size = 0x4, offset = 0x4, fixed_abs, tag = 'smem constant byte address 0x4 - core index']
  #allocation1 [shape = 'u32[144,128]{1,0:T(1,128)}', space=vmem, size = 0x12000, scoped, tag = 'internal scratch']
  %s0 = inlined_call_operand.vmem [shape: bf16[2,16,64], index: 0, kind: input, shape index: {}]
  %s1 = inlined_call_operand.vmem [shape: bf16[64,32], index: 1, kind: input, shape index: {}]
  %s2 = inlined_call_operand.vmem [shape: f32[17,32], index: 2, kind: input, shape index: {}]
  %s3 = inlined_call_operand.vmem [shape: bf16[2,17,32], index: 3, kind: output, shape index: {}]
  %s4 = sld [smem:[#allocation0]]
  $region45: #{tpu_custom_call.1} parent=0
    _
  %s6 = ssub.s32 1, %s4
  %s7 = scalar_select 0, %s6, %s4
  loop: start=0, step=1, limit=4
  $region2: #{tpu_custom_call.1} parent=0 // loop_pre_header
    _
  $region3: #{tpu_custom_call.1} parent=0 // loop_header
    %s9 = sphi 0, %s13
    %p10 = scmp.ge.s32.totalorder %s9, 4
    %s19 = sphi 0, %s21
    %s22 = sphi 0, %s19
    %s23 = sphi 0, %s22
    %s39 = sphi 0, %s23
    %s43 = sphi 0, %s43
    %s45 = sphi 0, %s43
    %s46 = sphi 0, %s45
    %s60 = sphi 0, %s46
    %s64 = sphi 0, %s64
    %s66 = sphi 0, %s64
    %s67 = sphi 0, %s66
    %s81 = sphi 0, %s67
    %s87 = sphi 0, %s89
    %s90 = sphi 0, %s87
    %s91 = sphi 0, %s90
    %s107 = sphi 0, %s91
  $region4: #{tpu_custom_call.1} parent=0 // loop_header_branch
    %12 = sbr.rel (%p10) target = $region8
  $region5: #{tpu_custom_call.1} parent=0 // loop_body
    %s14 = ssub.s32 %s9, 1
    %s15 = ssub.s32 %s9, 2
    %s16 = sadd.s32 %s9, 1
    %s17 = ssub.s32 %s9, %s16
    %p18 = scmp.eq.s32.totalorder %s17, 0
    %s20 = sadd.s32 %s19, 1
    %s21 = scalar_select %p18, %s19, %s20
    %p24 = pneg %p18
    %p25 = scmp.eq.s32.totalorder %s9, 1
    %p26 = por %p24, %p25
    %p27 = scmp.ne.s32.totalorder %s19, %s22
    %p28 = scmp.eq.s32.totalorder %s9, 0
    %p29 = por %p27, %p28
    %p30 = scmp.ne.s32.totalorder %s19, %s22
    %p31 = scmp.eq.s32.totalorder %s14, 1
    %p32 = por %p30, %p31
    %p33 = scmp.ne.s32.totalorder %s22, %s23
    %p34 = scmp.eq.s32.totalorder %s14, 0
    %p35 = por %p33, %p34
    %p36 = scmp.ne.s32.totalorder %s22, %s23
    %p37 = scmp.eq.s32.totalorder %s15, 1
    %p38 = por %p36, %p37
    %p40 = scmp.ne.s32.totalorder %s23, %s39
    %p41 = scmp.eq.s32.totalorder %s15, 0
    %p42 = por %p40, %p41
    %s44 = sadd.s32 %s43, 1
    %p47 = scmp.eq.s32.totalorder %s9, 1
    %p48 = scmp.ne.s32.totalorder %s43, %s45
    %p49 = scmp.eq.s32.totalorder %s9, 0
    %p50 = por %p48, %p49
    %p51 = scmp.ne.s32.totalorder %s43, %s45
    %p52 = scmp.eq.s32.totalorder %s14, 1
    %p53 = por %p51, %p52
    %p54 = scmp.ne.s32.totalorder %s45, %s46
    %p55 = scmp.eq.s32.totalorder %s14, 0
    %p56 = por %p54, %p55
    %p57 = scmp.ne.s32.totalorder %s45, %s46
    %p58 = scmp.eq.s32.totalorder %s15, 1
    %p59 = por %p57, %p58
    %p61 = scmp.ne.s32.totalorder %s46, %s60
    %p62 = scmp.eq.s32.totalorder %s15, 0
    %p63 = por %p61, %p62
    %s65 = sadd.s32 %s64, 1
    %p68 = scmp.eq.s32.totalorder %s9, 1
    %p69 = scmp.ne.s32.totalorder %s64, %s66
    %p70 = scmp.eq.s32.totalorder %s9, 0
    %p71 = por %p69, %p70
    %p72 = scmp.ne.s32.totalorder %s64, %s66
    %p73 = scmp.eq.s32.totalorder %s14, 1
    %p74 = por %p72, %p73
    %p75 = scmp.ne.s32.totalorder %s66, %s67
    %p76 = scmp.eq.s32.totalorder %s14, 0
    %p77 = por %p75, %p76
    %p78 = scmp.ne.s32.totalorder %s66, %s67
    %p79 = scmp.eq.s32.totalorder %s15, 1
    %p80 = por %p78, %p79
    %p82 = scmp.ne.s32.totalorder %s67, %s81
    %p83 = scmp.eq.s32.totalorder %s15, 0
    %p84 = por %p82, %p83
    %s85 = ssub.s32 %s9, %s16
    %p86 = scmp.eq.s32.totalorder %s85, 0
    %s88 = sadd.s32 %s87, 1
    %s89 = scalar_select %p86, %s87, %s88
    %p92 = pneg %p86
    %p93 = scmp.eq.s32.totalorder %s9, 1
    %p94 = por %p92, %p93
    %p95 = scmp.ne.s32.totalorder %s87, %s90
    %p96 = scmp.eq.s32.totalorder %s9, 0
    %p97 = por %p95, %p96
    %p98 = scmp.ne.s32.totalorder %s87, %s90
    %p99 = scmp.eq.s32.totalorder %s14, 1
    %p100 = por %p98, %p99
    %p101 = scmp.ne.s32.totalorder %s90, %s91
    %p102 = scmp.eq.s32.totalorder %s14, 0
    %p103 = por %p101, %p102
    %p104 = scmp.ne.s32.totalorder %s90, %s91
    %p105 = scmp.eq.s32.totalorder %s15, 1
    %p106 = por %p104, %p105
    %p108 = scmp.ne.s32.totalorder %s91, %s107
    %p109 = scmp.eq.s32.totalorder %s15, 0
    %p110 = por %p108, %p109
    %p111 = scmp.le.s32.totalorder 1, %s9
    %p112 = scmp.lt.s32.totalorder %s9, 3
    %p113 = pnand %p111, %p112
    %p114 = pneg %p113
    // Predicated region
    $region9: #{tpu_custom_call.1} parent=5 // pred_check
      _
    $region10: #{tpu_custom_call.1} parent=5 // pred_check_branch
      %116 = sbr.rel (%p113) target = $region12
    $region11: #{tpu_custom_call.1} parent=5 // pred_region
      %s117 = ssub.s32 %s9, 1
      // Predicated region
      $region13: #{tpu_custom_call.1} parent=11 // pred_check
        %p118 = pneg %p56
      $region14: #{tpu_custom_call.1} parent=11 // pred_check_branch
        %120 = sbr.rel (%p118) target = $region16
      $region15: #{tpu_custom_call.1} parent=11 // pred_region
        _
      $region16: #{tpu_custom_call.1} parent=11 // pred_fallthru
        _
      // Predicated region
      $region17: #{tpu_custom_call.1} parent=11 // pred_check
        %p121 = pneg %p77
      $region18: #{tpu_custom_call.1} parent=11 // pred_check_branch
        %123 = sbr.rel (%p121) target = $region20
      $region19: #{tpu_custom_call.1} parent=11 // pred_region
        _
      $region20: #{tpu_custom_call.1} parent=11 // pred_fallthru
        _
    $region12: #{tpu_custom_call.1} parent=5 // pred_fallthru
      _
    %p124 = scmp.lt.s32.totalorder %s9, 2
    // Predicated region
    $region21: #{tpu_custom_call.1} parent=5 // pred_check
      %p125 = pneg %p124
    $region22: #{tpu_custom_call.1} parent=5 // pred_check_branch
      %127 = sbr.rel (%p125) target = $region24
    $region23: #{tpu_custom_call.1} parent=5 // pred_region
      // Predicated region
      $region25: #{tpu_custom_call.1} parent=23 // pred_check
        %p128 = pneg %p29
      $region26: #{tpu_custom_call.1} parent=23 // pred_check_branch
        %130 = sbr.rel (%p128) target = $region28
      $region27: #{tpu_custom_call.1} parent=23 // pred_region
        %p131 = scmp.lt.s32.totalorder %s9, 1
        %s132 = scalar_select %p131, %s9, 1
        %s133 = smul.addr %s132, 2
        %s134 = smul.addr %s133, 4
        %s135 = scalar_lea.vmem %s0, %s134
      $region28: #{tpu_custom_call.1} parent=23 // pred_fallthru
        _
    $region24: #{tpu_custom_call.1} parent=5 // pred_fallthru
      _
    %p136 = scmp.le.s32.totalorder 1, %s9
    %p137 = scmp.lt.s32.totalorder %s9, 3
    %p138 = pnand %p136, %p137
    %p139 = pneg %p138
    // Predicated region
    $region29: #{tpu_custom_call.1} parent=5 // pred_check
      _
    $region30: #{tpu_custom_call.1} parent=5 // pred_check_branch
      %141 = sbr.rel (%p138) target = $region32
    $region31: #{tpu_custom_call.1} parent=5 // pred_region
      %s142 = ssub.s32 %s9, 1
      %p143 = scmp.lt.s32.totalorder %s14, 1
      %s144 = scalar_select %p143, %s14, 1
      %s145 = smul.addr %s144, 2
      %s146 = smul.addr %s145, 4
      %s147 = scalar_lea.vmem %s0, %s146
      %p148 = pneg %p35
      %p149 = pneg %p32
      %p150 = pneg %p56
      %p151 = pneg %p53
      %p152 = pneg %p77
      %p153 = pneg %p74
      %p154 = pneg %p103
      %p155 = pneg %p100
      %p156 = scmp.lt.s32.totalorder %s14, 1
      %s157 = scalar_select %p156, %s14, 1
      %s158 = smul.addr %s157, 3
      %s159 = smul.addr %s158, 4
      %s160 = scalar_lea.vmem %s3, %s159
      %p161 = scmp.lt.s32.totalorder %s14, 1
      %s162 = scalar_select %p161, %s14, 1
      %s163 = smul.addr %s162, 2
      %s164 = smul.addr %s163, 4
      %s165 = scalar_lea.vmem %s0, %s164
      %p166 = scmp.lt.s32.totalorder %s14, 1
      %s167 = scalar_select %p166, %s14, 1
      %s168 = smul.addr %s167, 3
      %s169 = smul.addr %s168, 4
      %s170 = scalar_lea.vmem %s3, %s169
      %v172 = vld [vmem:[%s165] sm:$0xf]
      %v173 = vld [vmem:[%s165 + $0x4] sm:$0xf]
      %v174 = vld [vmem:[%s1] sm:$0xf]
      %v175 = vld [vmem:[%s1 + $0x4] sm:$0xf]
      %v176 = vld [vmem:[%s1 + $0x8] sm:$0xf]
      %v177 = vld [vmem:[%s1 + $0xc] sm:$0xf]
      %v178 = vld [vmem:[%s1 + $0x10] sm:$0xf]
      %v179 = vld [vmem:[%s1 + $0x14] sm:$0xf]
      %v180 = vld [vmem:[%s1 + $0x18] sm:$0xf]
      %v181 = vld [vmem:[%s1 + $0x1c] sm:$0xf]
      %v182 = vld [vmem:[%s2 + $0x1] sm:$0xff]
      %v183 = vld [vmem:[%s2 + $0x9] sm:$0xff]
      %v186 = vunpack.c.l.b16 %v172
      %v187 = vunpack.c.l.b16 %v173
      %v188 = vpack.c.b16 %v187, %v186
      %v197 = vunpack.c.l.b16 %v174
      %v198 = vunpack.c.l.b16 %v175
      %v199 = vunpack.c.l.b16 %v176
      %v200 = vunpack.c.l.b16 %v177
      %v201 = vunpack.c.l.b16 %v178
      %v202 = vunpack.c.l.b16 %v179
      %v203 = vunpack.c.l.b16 %v180
      %v204 = vunpack.c.l.b16 %v181
      %v205 = vpack.c.b16 %v198, %v197
      %v206 = vpack.c.b16 %v200, %v199
      %v207 = vpack.c.b16 %v202, %v201
      %v208 = vpack.c.b16 %v204, %v203
      %vm213 = vcmask 523264
      %v215 = vsel %vm213, %v188, 0
      %217 = vmatprep.subr.bf16.mxu0 0
      %218 = vmatpush1.bf16.msra.mxu0 %v205
      %219 = vmatprep.subr.bf16.mxu0 0
      %220 = vmatpush1.bf16.msra.mxu0 %v206
      %221 = vmatprep.subr.bf16.mxu0 0
      %222 = vmatpush1.bf16.msra.mxu0 %v207
      %223 = vmatprep.subr.bf16.mxu0 0
      %224 = vmatpush1.bf16.msra.mxu0 %v208
      %225 = vmatprep.subr.bf16.mxu0 0
      %226 = vmatpush1.bf16.msra.mxu0 0
      %227 = vmatprep.subr.bf16.mxu0 0
      %228 = vmatpush1.bf16.msra.mxu0 0
      %229 = vmatprep.subr.bf16.mxu0 0
      %230 = vmatpush1.bf16.msra.mxu0 0
      %231 = vmatprep.subr.bf16.mxu0 0
      %232 = vmatpush1.bf16.msra.mxu0 0
      %233 = vmatprep.subr.bf16.mxu0 0
      %234 = vmatpush1.bf16.msra.mxu0 0
      %235 = vmatprep.subr.bf16.mxu0 0
      %236 = vmatpush1.bf16.msra.mxu0 0
      %237 = vmatprep.subr.bf16.mxu0 0
      %238 = vmatpush1.bf16.msra.mxu0 0
      %239 = vmatprep.subr.bf16.mxu0 0
      %240 = vmatpush1.bf16.msra.mxu0 0
      %241 = vmatprep.subr.bf16.mxu0 0
      %242 = vmatpush1.bf16.msra.mxu0 0
      %243 = vmatprep.subr.bf16.mxu0 0
      %244 = vmatpush1.bf16.msra.mxu0 0
      %245 = vmatprep.subr.bf16.mxu0 0
      %246 = vmatpush1.bf16.msra.mxu0 0
      %247 = vmatprep.subr.bf16.mxu0 0
      %248 = vmatpush1.bf16.msra.mxu0 0
      %249 = vmatprep.mubr.bf16.mxu0 0
      %250 = vmatmul.mubr.bf16.gmra.mrb[0].mxu0 %v215
      %v251 = vpop.f32.mrb[0].mxu0
      %v252 = vadd.f32 %v182, %v251
      %v253 = vpop.f32.mrb[0].mxu0
      %v254 = vpop.f32.mrb[0].mxu0
      %v255 = vadd.f32 %v183, %v254
      %v256 = vpop.f32.mrb[0].mxu0
      %257 = vdwg.mxu0
      %v258 = vpack.c.bf16 %v255, %v252
      %v260 = vunpack.c.l.b16 %v258
      %v261 = vunpack.c.h.b16 %v258
      %v262 = vpack.c.b16 %v260, %v260
      %v263 = vpack.c.b16 %v261, %v261
      %vm264 = vsmask.f32 256
      %vm265 = vsmask.f32 4368
      %vm266 = vmor %vm264, %vm265
      %v268 = vshrl.u32 %v262, 16
      %v270 = vrot.slane %v268, 7
      %v271 = vshll.u32 %v262, 16
      %v273 = vor.u32 %v270, %v271
      %v274 = vrot.slane %v270, 4
      %v276 = vshrl.u32 %v263, 16
      %v278 = vrot.slane %v276, 7
      %v279 = vshll.u32 %v263, 16
      %v281 = vor.u32 %v278, %v279
      %v282 = vsel %vm266, %v274, %v281
      %v283 = vrot.slane %v278, 4
      %vm287 = vcmask 257024
      %vm288 = vsmask.f32 7938
      %vm289 = vmand %vm287, %vm288
      %v290 = vld [vmem:[%s170] sm:$0xf]
      %v291 = vsel %vm289, %v273, %v290
      %292 = vst [vmem:[%s170] sm:$0xf] %v291
      %vm293 = vcmask 257024
      %294 = vst.msk [vmem:[%s170 + $0x4] sm:$0xf] %vm293, %v282
      %vm295 = vcmask 253952
      %vm296 = vmand %vm295, %vm264
      %v297 = vld [vmem:[%s170 + $0x8] sm:$0x1]
      %v298 = vsel %vm296, %v283, %v297
      %299 = vst [vmem:[%s170 + $0x8] sm:$0x1] %v298
      %v300 = vld [vmem:[%s2] sm:$0x1]
      %v301 = vpack.c.bf16 %v300, %v300
      %v302 = vld [vmem:[%s170] sm:$0x1]
      %v303 = vsel %vm296, %v301, %v302
      %304 = vst [vmem:[%s170] sm:$0x1] %v303
      %p305 = scmp.lt.s32.totalorder %s14, 1
      %s306 = scalar_select %p305, %s14, 1
      %s307 = smul.addr %s306, 3
      %s308 = smul.addr %s307, 4
      %s309 = scalar_lea.vmem %s3, %s308
      // Predicated region
      $region33: #{tpu_custom_call.1} parent=31 // pred_check
        %p310 = pneg %p100
      $region34: #{tpu_custom_call.1} parent=31 // pred_check_branch
        %312 = sbr.rel (%p310) target = $region36
      $region35: #{tpu_custom_call.1} parent=31 // pred_region
        _
      $region36: #{tpu_custom_call.1} parent=31 // pred_fallthru
        _
    $region32: #{tpu_custom_call.1} parent=5 // pred_fallthru
      _
    %p313 = scmp.le.s32.totalorder 2, %s9
    // Predicated region
    $region37: #{tpu_custom_call.1} parent=5 // pred_check
      %p314 = pneg %p313
    $region38: #{tpu_custom_call.1} parent=5 // pred_check_branch
      %316 = sbr.rel (%p314) target = $region40
    $region39: #{tpu_custom_call.1} parent=5 // pred_region
      %s317 = ssub.s32 %s9, 2
      // Predicated region
      $region41: #{tpu_custom_call.1} parent=39 // pred_check
        %p318 = pneg %p106
      $region42: #{tpu_custom_call.1} parent=39 // pred_check_branch
        %320 = sbr.rel (%p318) target = $region44
      $region43: #{tpu_custom_call.1} parent=39 // pred_region
        %p321 = scmp.lt.s32.totalorder %s15, 1
        %s322 = scalar_select %p321, %s15, 1
        %s323 = smul.addr %s322, 3
        %s324 = smul.addr %s323, 4
        %s325 = scalar_lea.vmem %s3, %s324
      $region44: #{tpu_custom_call.1} parent=39 // pred_fallthru
        _
    $region40: #{tpu_custom_call.1} parent=5 // pred_fallthru
      _
  $region6: #{tpu_custom_call.1} parent=0 // loop_footer
    %s13 = sadd.s32 1, %s9
  $region7: #{tpu_custom_call.1} parent=0 // loop_footer_branch
    %8 = sbr.rel target = $region3
  $region8: #{tpu_custom_call.1} parent=0 // loop_exit
    _

</llo_original>
